<compile_context>
chip_gen: v5e
topology: v5e:2x2
jax: 0.10.0
libtpu: 0.0.40
codegen_flags: <defaults>
</compile_context>

<pallas_src>
import functools

import numpy as np
import jax
import jax.numpy as jnp
from jax.experimental import pallas as pl
from jax.experimental.pallas import tpu as pltpu


# ----------------------------------------------------------------------------
# Parameter init (deterministic): orthogonal with gain sqrt(2), zero bias,
# matching the module's init_() helper.  Host-side numpy is construction glue.
# ----------------------------------------------------------------------------
def _orthogonal(rng, out_dim, in_dim, gain):
    rows, cols = max(out_dim, in_dim), min(out_dim, in_dim)
    a = rng.standard_normal((rows, cols)).astype(np.float32)
    q, r = np.linalg.qr(a)
    q = q * np.sign(np.diag(r))
    if out_dim < in_dim:
        q = q.T
    return (gain * q[:out_dim, :in_dim]).astype(np.float32)


def make_params(num_inputs, hidden_size, seed=0):
    rng = np.random.default_rng(seed)
    gain = np.sqrt(2.0)
    H = hidden_size

    def linear(out_d, in_d):
        w = _orthogonal(rng, out_d, in_d, gain)      # torch layout [out, in]
        b = np.zeros((1, out_d), dtype=np.float32)
        return w, b

    # actor: Linear(in, H) -> Tanh -> Linear(H, H) -> Tanh
    aw1, ab1 = linear(H, num_inputs)
    aw2, ab2 = linear(H, H)
    # critic: Linear(in, H) -> Tanh -> Linear(H, H) -> Tanh -> Linear(H, 1)
    cw1, cb1 = linear(H, num_inputs)
    cw2, cb2 = linear(H, H)
    cw3, cb3 = linear(1, H)

    # ---- fused, kernel-facing parameters ------------------------------------
    w1 = np.concatenate([aw1.T, cw1.T], axis=1)              # [num_inputs, 2H]
    b1 = np.concatenate([ab1, cb1], axis=1)                  # [1, 2H]
    w2 = np.zeros((2 * H, 2 * H), dtype=np.float32)          # block-diagonal
    w2[:H, :H] = aw2.T
    w2[H:, H:] = cw2.T
    b2 = np.concatenate([ab2, cb2], axis=1)                  # [1, 2H]
    w3 = np.zeros((1, 2 * H), dtype=np.float32)              # zero over actor lanes
    w3[0, H:] = cw3[0, :]
    b3 = cb3.reshape(1, 1)

    params = {
        "hidden": H,
        "w1": jnp.asarray(w1, jnp.bfloat16),   # MXU operands stored bf16
        "b1": jnp.asarray(b1, jnp.float32),
        "w2": jnp.asarray(w2, jnp.bfloat16),
        "b2": jnp.asarray(b2, jnp.float32),
        "w3": jnp.asarray(w3, jnp.float32),    # VPU reduce stays f32
        "b3": jnp.asarray(b3, jnp.float32),
        # original per-head (torch-layout) weights, f32, for the reference path
        "torch": {k: jnp.asarray(v) for k, v in dict(
            aw1=aw1, ab1=ab1, aw2=aw2, ab2=ab2,
            cw1=cw1, cb1=cb1, cw2=cw2, cb2=cb2, cw3=cw3, cb3=cb3).items()},
    }
    return params


# ----------------------------------------------------------------------------
# Pallas kernel: fused actor + critic MLP forward, lane-dense packed output.
# ----------------------------------------------------------------------------
def _actor_critic_kernel(x_ref, w1_ref, b1_ref, w2_ref, b2_ref, w3_ref, b3_ref,
                         out_ref, *, hidden):
    x = x_ref[...].astype(w1_ref.dtype)                      # bf16 MXU operand

    # layer 1: one full 128-lane matmul covering both heads.
    h1 = jnp.tanh(
        jnp.dot(x, w1_ref[...], preferred_element_type=jnp.float32)
        + b1_ref[...])                                       # (bm, 2H) f32

    # layer 2: block-diagonal weight -> one full MXU tile for both heads.
    h2 = jnp.tanh(
        jnp.dot(h1.astype(w2_ref.dtype), w2_ref[...],
                preferred_element_type=jnp.float32)
        + b2_ref[...])                                       # (bm, 2H) f32
    # h2[:, :H]  = actor features, h2[:, H:] = critic hidden.

    # critic projection as VPU multiply + lane reduce (w3 is zero over actor lanes).
    critic = jnp.sum(h2 * w3_ref[...], axis=-1, keepdims=True) + b3_ref[0, 0]

    # Pack into one lane-dense (bm, 2H) slab: actor in [:H], critic broadcast in [H:].
    lane = jax.lax.broadcasted_iota(jnp.int32, h2.shape, dimension=1)
    out_ref[...] = jnp.where(lane < hidden, h2, critic)


def actor_critic_forward(params, x, rnn_hxs, masks):
    """Returns (critic_value [N,1], actor_features [N,H], rnn_hxs)."""
    del masks  # unused when recurrent=False
    n, num_inputs = x.shape
    hidden = params["hidden"]
    width = 2 * hidden                                       # 128 for H=64

    # Batch tile: multiple of 8 sublanes; 512 rows for large batches (pipelining),
    # small batches get a single padded block.
    bm = 512 if n >= 512 else max(8, ((n + 7) // 8) * 8)
    n_pad = ((n + bm - 1) // bm) * bm
    x_in = x if n_pad == n else jnp.pad(x, ((0, n_pad - n), (0, 0)))
    grid = (n_pad // bm,)

    const = lambda i: (0, 0)   # weights/biases resident across the batch grid

    out = pl.pallas_call(
        functools.partial(_actor_critic_kernel, hidden=hidden),
        out_shape=jax.ShapeDtypeStruct((n_pad, width), jnp.float32),
        grid=grid,
        in_specs=[
            pl.BlockSpec((bm, num_inputs), lambda i: (i, 0)),      # x tiles
            pl.BlockSpec((num_inputs, width), const),              # w1 (bf16)
            pl.BlockSpec((1, width), const),                       # b1
            pl.BlockSpec((width, width), const),                   # w2 (bf16)
            pl.BlockSpec((1, width), const),                       # b2
            pl.BlockSpec((1, width), const),                       # w3 row
            pl.BlockSpec(memory_space=pltpu.MemorySpace.SMEM),     # b3 scalar
        ],
        out_specs=pl.BlockSpec((bm, width), lambda i: (i, 0)),
        compiler_params=pltpu.CompilerParams(
            dimension_semantics=("parallel",)),                    # megacore on v7x
    )(x_in, params["w1"], params["b1"], params["w2"], params["b2"],
      params["w3"], params["b3"])

    actor = out[:n, :hidden]
    critic = out[:n, hidden:hidden + 1]
    # recurrent=False: rnn_hxs passes straight through.
    return critic, actor, rnn_hxs


# ----------------------------------------------------------------------------
# Reference (plain JAX, unfused per-head path) for correctness check.
# Uses the same bf16 cast on MXU operands as the kernel so tolerances stay tight.
# ----------------------------------------------------------------------------
def reference_forward(params, x):
    p = params["torch"]

    def lin_bf16(h, w, b):
        return jnp.dot(h.astype(jnp.bfloat16), w.astype(jnp.bfloat16).T,
                       preferred_element_type=jnp.float32) + b

    ah = jnp.tanh(lin_bf16(x, p["aw1"], p["ab1"]))
    actor = jnp.tanh(lin_bf16(ah, p["aw2"], p["ab2"]))
    ch = jnp.tanh(lin_bf16(x, p["cw1"], p["cb1"]))
    ch = jnp.tanh(lin_bf16(ch, p["cw2"], p["cb2"]))
    critic = jnp.dot(ch, p["cw3"].T) + p["cb3"]   # final projection in f32 (as kernel)
    return critic, actor


if __name__ == "__main__":
    NUM_INPUTS = 32
    HIDDEN = 64
    BATCH = 8

    params = make_params(NUM_INPUTS, HIDDEN, seed=0)

    key = jax.random.PRNGKey(0)
    kx, _ = jax.random.split(key)
    x = jax.random.normal(kx, (BATCH, NUM_INPUTS), dtype=jnp.float32)
    # recurrent_hidden_state_size == 1 when recurrent=False
    rnn_hxs = jnp.zeros((BATCH, 1), dtype=jnp.float32)
    masks = jnp.ones((BATCH, 1), dtype=jnp.float32)

    critic, actor, hxs_out = actor_critic_forward(params, x, rnn_hxs, masks)
    jax.block_until_ready((critic, actor, hxs_out))

    critic_ref, actor_ref = reference_forward(params, x)
    assert critic.shape == (BATCH, 1) and actor.shape == (BATCH, HIDDEN)
    np.testing.assert_allclose(np.asarray(critic), np.asarray(critic_ref),
                               rtol=1e-2, atol=1e-2)
    np.testing.assert_allclose(np.asarray(actor), np.asarray(actor_ref),
                               rtol=1e-2, atol=1e-2)
    np.testing.assert_array_equal(np.asarray(hxs_out), np.asarray(rnn_hxs))

    print("KERNEL_OK")
</pallas_src>

<mosaic_0001>
module attributes {stable_mosaic.version = 11 : i64} {
  func.func @_actor_critic_kernel(%arg0: i32, %arg1: memref<8x32xf32, #tpu.memory_space<vmem>>, %arg2: memref<32x128xbf16, #tpu.memory_space<vmem>>, %arg3: memref<1x128xf32, #tpu.memory_space<vmem>>, %arg4: memref<128x128xbf16, #tpu.memory_space<vmem>>, %arg5: memref<1x128xf32, #tpu.memory_space<vmem>>, %arg6: memref<1x128xf32, #tpu.memory_space<vmem>>, %arg7: memref<1x1xf32, #tpu.memory_space<smem>>, %arg8: memref<8x128xf32, #tpu.memory_space<vmem>>) attributes {dimension_semantics = [#tpu.dimension_semantics<parallel>], iteration_bounds = array<i64: 1>, scalar_prefetch = 0 : i64, scratch_operands = 0 : i64, tpu.core_type = #tpu.core_type<tc>, window_params = [{transform_indices = @transform_0, window_bounds = array<i64: 8, 32>}, {pipeline_mode = #tpu.pipeline_mode<synchronous>, transform_indices = @transform_1, window_bounds = array<i64: 32, 128>}, {pipeline_mode = #tpu.pipeline_mode<synchronous>, transform_indices = @transform_2, window_bounds = array<i64: 1, 128>}, {pipeline_mode = #tpu.pipeline_mode<synchronous>, transform_indices = @transform_3, window_bounds = array<i64: 128, 128>}, {pipeline_mode = #tpu.pipeline_mode<synchronous>, transform_indices = @transform_4, window_bounds = array<i64: 1, 128>}, {pipeline_mode = #tpu.pipeline_mode<synchronous>, transform_indices = @transform_5, window_bounds = array<i64: 1, 128>}, {transform_indices = @transform_6, window_bounds = array<i64: 1, 1>}, {transform_indices = @transform_7, window_bounds = array<i64: 8, 128>}]} {
    %c0 = arith.constant 0 : index
    %c0_0 = arith.constant 0 : index
    %0 = vector.load %arg1[%c0, %c0_0] : memref<8x32xf32, #tpu.memory_space<vmem>>, vector<8x32xf32>
    %1 = arith.truncf %0 : vector<8x32xf32> to vector<8x32xbf16>
    %c0_1 = arith.constant 0 : index
    %c0_2 = arith.constant 0 : index
    %2 = vector.load %arg2[%c0_1, %c0_2] : memref<32x128xbf16, #tpu.memory_space<vmem>>, vector<32x128xbf16>
    %cst = arith.constant dense<0.000000e+00> : vector<8x128xf32>
    %3 = tpu.matmul %1, %2, %cst {dimension_numbers = #tpu.dot_dimension_numbers<[1], [0], [0], [1], [0, 0, 1, 1], [], []>} : vector<8x32xbf16>, vector<32x128xbf16>, vector<8x128xf32> -> vector<8x128xf32>
    %c0_3 = arith.constant 0 : index
    %c0_4 = arith.constant 0 : index
    %4 = vector.load %arg3[%c0_3, %c0_4] : memref<1x128xf32, #tpu.memory_space<vmem>>, vector<1x128xf32>
    %5 = vector.broadcast %4 : vector<1x128xf32> to vector<8x128xf32>
    %6 = arith.addf %3, %5 : vector<8x128xf32>
    %7 = math.tanh %6 : vector<8x128xf32>
    %8 = arith.truncf %7 : vector<8x128xf32> to vector<8x128xbf16>
    %c0_5 = arith.constant 0 : index
    %c0_6 = arith.constant 0 : index
    %9 = vector.load %arg4[%c0_5, %c0_6] : memref<128x128xbf16, #tpu.memory_space<vmem>>, vector<128x128xbf16>
    %cst_7 = arith.constant dense<0.000000e+00> : vector<8x128xf32>
    %10 = tpu.matmul %8, %9, %cst_7 {dimension_numbers = #tpu.dot_dimension_numbers<[1], [0], [0], [1], [0, 0, 1, 1], [], []>} : vector<8x128xbf16>, vector<128x128xbf16>, vector<8x128xf32> -> vector<8x128xf32>
    %c0_8 = arith.constant 0 : index
    %c0_9 = arith.constant 0 : index
    %11 = vector.load %arg5[%c0_8, %c0_9] : memref<1x128xf32, #tpu.memory_space<vmem>>, vector<1x128xf32>
    %12 = vector.broadcast %11 : vector<1x128xf32> to vector<8x128xf32>
    %13 = arith.addf %10, %12 : vector<8x128xf32>
    %14 = math.tanh %13 : vector<8x128xf32>
    %c0_10 = arith.constant 0 : index
    %c0_11 = arith.constant 0 : index
    %15 = vector.load %arg6[%c0_10, %c0_11] : memref<1x128xf32, #tpu.memory_space<vmem>>, vector<1x128xf32>
    %16 = vector.broadcast %15 : vector<1x128xf32> to vector<8x128xf32>
    %17 = arith.mulf %14, %16 : vector<8x128xf32>
    %cst_12 = arith.constant dense<0.000000e+00> : vector<8xf32>
    %18 = vector.multi_reduction <add>, %17, %cst_12 [1] : vector<8x128xf32> to vector<8xf32>
    %19 = vector.shape_cast %18 : vector<8xf32> to vector<8x1xf32>
    %c0_13 = arith.constant 0 : index
    %c0_14 = arith.constant 0 : index
    %20 = memref.load %arg7[%c0_13, %c0_14] : memref<1x1xf32, #tpu.memory_space<smem>>
    %21 = vector.broadcast %20 : f32 to vector<8x1xf32>
    %22 = arith.addf %19, %21 : vector<8x1xf32>
    %23 = tpu.iota {dimensions = array<i32: 1>} : vector<8x128xi32>
    %c64_i32 = arith.constant 64 : i32
    %24 = vector.broadcast %c64_i32 : i32 to vector<8x128xi32>
    %25 = arith.cmpi slt, %23, %24 : vector<8x128xi32>
    %26 = vector.shape_cast %22 : vector<8x1xf32> to vector<8x1xf32>
    %27 = vector.broadcast %26 : vector<8x1xf32> to vector<8x128xf32>
    %28 = arith.select %25, %14, %27 : vector<8x128xi1>, vector<8x128xf32>
    %c0_15 = arith.constant 0 : index
    %c0_16 = arith.constant 0 : index
    %29 = vector.load %arg8[%c0_15, %c0_16] : memref<8x128xf32, #tpu.memory_space<vmem>>, vector<8x128xf32>
    tpu.vector_store %arg8[%c0_15, %c0_16], %28 {strides = array<i32>} : memref<8x128xf32, #tpu.memory_space<vmem>>, vector<8x128xf32>,
    return
  }
  func.func @transform_0(%arg0: i32) -> (i32, i32) {
    %c0_i32 = arith.constant 0 : i32
    %c0_i32_0 = arith.constant 0 : i32
    return %arg0, %c0_i32 : i32, i32
  }
  func.func @transform_1(%arg0: i32) -> (i32, i32) {
    %c0_i32 = arith.constant 0 : i32
    %c0_i32_0 = arith.constant 0 : i32
    %c0_i32_1 = arith.constant 0 : i32
    return %c0_i32, %c0_i32_0 : i32, i32
  }
  func.func @transform_2(%arg0: i32) -> (i32, i32) {
    %c0_i32 = arith.constant 0 : i32
    %c0_i32_0 = arith.constant 0 : i32
    %c0_i32_1 = arith.constant 0 : i32
    return %c0_i32, %c0_i32_0 : i32, i32
  }
  func.func @transform_3(%arg0: i32) -> (i32, i32) {
    %c0_i32 = arith.constant 0 : i32
    %c0_i32_0 = arith.constant 0 : i32
    %c0_i32_1 = arith.constant 0 : i32
    return %c0_i32, %c0_i32_0 : i32, i32
  }
  func.func @transform_4(%arg0: i32) -> (i32, i32) {
    %c0_i32 = arith.constant 0 : i32
    %c0_i32_0 = arith.constant 0 : i32
    %c0_i32_1 = arith.constant 0 : i32
    return %c0_i32, %c0_i32_0 : i32, i32
  }
  func.func @transform_5(%arg0: i32) -> (i32, i32) {
    %c0_i32 = arith.constant 0 : i32
    %c0_i32_0 = arith.constant 0 : i32
    %c0_i32_1 = arith.constant 0 : i32
    return %c0_i32, %c0_i32_0 : i32, i32
  }
  func.func @transform_6(%arg0: i32) -> (i32, i32) {
    %c0_i32 = arith.constant 0 : i32
    %c0_i32_0 = arith.constant 0 : i32
    %c0_i32_1 = arith.constant 0 : i32
    return %c0_i32, %c0_i32_0 : i32, i32
  }
  func.func @transform_7(%arg0: i32) -> (i32, i32) {
    %c0_i32 = arith.constant 0 : i32
    %c0_i32_0 = arith.constant 0 : i32
    return %arg0, %c0_i32 : i32, i32
  }
}

</mosaic_0001>

<llo_original>
// kernel: tpu_custom_call.1
$region0: #{tpu_custom_call.1}
  #allocation0 [shape = 'u32[]', space=smem, size = 0x4, offset = 0x4, fixed_abs, tag = 'smem constant byte address 0x4 - core index']
  #allocation1 [shape = 'u32[72,128]{1,0:T(1,128)}', space=vmem, size = 0x9000, scoped, tag = 'internal scratch']
  #allocation2 [shape = 'f32[1,1]{1,0:T(1,128)S(6)}', space=smem, size = 0x200, scoped, tag = 'scoped memory for tpu_custom_call.1']
  %s0 = inlined_call_operand.hbm [shape: f32[8,32], index: 0, kind: input, shape index: {}]
  %s1 = inlined_call_operand.hbm [shape: bf16[32,128], index: 1, kind: input, shape index: {}]
  %s2 = inlined_call_operand.vmem [shape: f32[1,128], index: 2, kind: input, shape index: {}]
  %s3 = inlined_call_operand.hbm [shape: bf16[128,128], index: 3, kind: input, shape index: {}]
  %s4 = inlined_call_operand.vmem [shape: f32[1,128], index: 4, kind: input, shape index: {}]
  %s5 = inlined_call_operand.vmem [shape: f32[1,128], index: 5, kind: input, shape index: {}]
  %s6 = inlined_call_operand.<no memory space> [shape: f32[1,1], index: 6, kind: input, shape index: {}]
  %s7 = inlined_call_operand.hbm [shape: f32[8,128], index: 7, kind: output, shape index: {}]
  %s8 = sld [smem:[#allocation0]]
  $region50: #{tpu_custom_call.1} parent=0
    _
  %s10 = ssub.s32 1, %s8
  %s11 = scalar_select 0, %s10, %s8
  %12 = sst [smem:[#allocation2]] %s6
  $region1: #{tpu_custom_call.1} parent=0
    #allocation3 [shape = 'u8[4096]{0}', space=vmem, size = 0x1000, scoped, tag = 'input window, operand 0, single buffered']
    #allocation4 [shape = 's32[1]{0}', space=sflag, size = 0x4, scoped, tag = 'scoped memory for tpu_custom_call.1']
    #allocation5 [shape = 's32[1]{0}', space=sflag, size = 0x4, scoped, tag = 'scoped memory for tpu_custom_call.1']
    #allocation6 [shape = 'u8[8192]{0}', space=vmem, size = 0x2000, scoped, tag = 'input window, operand 1, single buffered']
    #allocation7 [shape = 's32[1]{0}', space=sflag, size = 0x4, scoped, tag = 'scoped memory for tpu_custom_call.1']
    #allocation8 [shape = 'u8[32768]{0}', space=vmem, size = 0x8000, scoped, tag = 'input window, operand 3, single buffered']
    #allocation9 [shape = 'u8[4096]{0}', space=vmem, size = 0x1000, scoped, tag = 'output window, operand 0, single buffered']
    %13 = vsyncpa [#allocation4], 0
    %14 = vsyncpa [#allocation7], 0
    %15 = vsyncpa [#allocation5], 0
    // Predicated region
    $region2: #{tpu_custom_call.1} parent=1 // pred_check
      _
    $region3: #{tpu_custom_call.1} parent=1 // pred_check_branch
      %17 = sbr.rel (0) target = $region5
    $region4: #{tpu_custom_call.1} parent=1 // pred_region
      %19 = vsyncadd [#allocation4], 0
      %s21 = sshll.u32 %s0, 4
      %s22 = int_to_ptr.hbm [resolvable:$true] %s21
      %s23 = sshll.u32 [#allocation3], 4
      %s24 = int_to_ptr.vmem [resolvable:$true] %s23
      %26 = dma.hbm_to_vmem [thread:$0]  %s22, 128, %s24, [#allocation4]
    $region5: #{tpu_custom_call.1} parent=1 // pred_fallthru
      _
    // Predicated region
    $region6: #{tpu_custom_call.1} parent=1 // pred_check
      _
    $region7: #{tpu_custom_call.1} parent=1 // pred_check_branch
      %28 = sbr.rel (0) target = $region9
    $region8: #{tpu_custom_call.1} parent=1 // pred_region
      %30 = vsyncadd [#allocation7], 0
      %s31 = sshll.u32 %s1, 4
      %s32 = int_to_ptr.hbm [resolvable:$true] %s31
      %s33 = sshll.u32 [#allocation6], 4
      %s34 = int_to_ptr.vmem [resolvable:$true] %s33
      %39 = dma.hbm_to_vmem [thread:$0]  %s32, 256, %s34, [#allocation7], 64, 64, 4
    $region9: #{tpu_custom_call.1} parent=1 // pred_fallthru
      _
    // Predicated region
    $region10: #{tpu_custom_call.1} parent=1 // pred_check
      _
    $region11: #{tpu_custom_call.1} parent=1 // pred_check_branch
      %41 = sbr.rel (0) target = $region13
    $region12: #{tpu_custom_call.1} parent=1 // pred_region
      _
    $region13: #{tpu_custom_call.1} parent=1 // pred_fallthru
      _
    // Predicated region
    $region14: #{tpu_custom_call.1} parent=1 // pred_check
      _
    $region15: #{tpu_custom_call.1} parent=1 // pred_check_branch
      %43 = sbr.rel (0) target = $region17
    $region16: #{tpu_custom_call.1} parent=1 // pred_region
      %45 = vsyncadd [#allocation7], 0
      %s46 = sshll.u32 %s3, 4
      %s47 = int_to_ptr.hbm [resolvable:$true] %s46
      %s48 = sshll.u32 [#allocation8], 4
      %s49 = int_to_ptr.vmem [resolvable:$true] %s48
      %54 = dma.hbm_to_vmem [thread:$0]  %s47, 1024, %s49, [#allocation7], 64, 64, 4
    $region17: #{tpu_custom_call.1} parent=1 // pred_fallthru
      _
    // Predicated region
    $region18: #{tpu_custom_call.1} parent=1 // pred_check
      _
    $region19: #{tpu_custom_call.1} parent=1 // pred_check_branch
      %56 = sbr.rel (0) target = $region21
    $region20: #{tpu_custom_call.1} parent=1 // pred_region
      _
    $region21: #{tpu_custom_call.1} parent=1 // pred_fallthru
      _
    // Predicated region
    $region22: #{tpu_custom_call.1} parent=1 // pred_check
      _
    $region23: #{tpu_custom_call.1} parent=1 // pred_check_branch
      %58 = sbr.rel (0) target = $region25
    $region24: #{tpu_custom_call.1} parent=1 // pred_region
      _
    $region25: #{tpu_custom_call.1} parent=1 // pred_fallthru
      _
    // Predicated region
    $region26: #{tpu_custom_call.1} parent=1 // pred_check
      _
    $region27: #{tpu_custom_call.1} parent=1 // pred_check_branch
      %60 = sbr.rel (0) target = $region29
    $region28: #{tpu_custom_call.1} parent=1 // pred_region
      _
    $region29: #{tpu_custom_call.1} parent=1 // pred_fallthru
      _
    // Predicated region
    $region30: #{tpu_custom_call.1} parent=1 // pred_check
      _
    $region31: #{tpu_custom_call.1} parent=1 // pred_check_branch
      %62 = sbr.rel (0) target = $region33
    $region32: #{tpu_custom_call.1} parent=1 // pred_region
      %64 = dma.done [#allocation4], 128
    $region33: #{tpu_custom_call.1} parent=1 // pred_fallthru
      _
    // Predicated region
    $region34: #{tpu_custom_call.1} parent=1 // pred_check
      _
    $region35: #{tpu_custom_call.1} parent=1 // pred_check_branch
      %66 = sbr.rel (0) target = $region37
    $region36: #{tpu_custom_call.1} parent=1 // pred_region
      %68 = dma.done [#allocation7], 256
    $region37: #{tpu_custom_call.1} parent=1 // pred_fallthru
      _
    // Predicated region
    $region38: #{tpu_custom_call.1} parent=1 // pred_check
      _
    $region39: #{tpu_custom_call.1} parent=1 // pred_check_branch
      %70 = sbr.rel (0) target = $region41
    $region40: #{tpu_custom_call.1} parent=1 // pred_region
      %72 = dma.done [#allocation7], 1024
    $region41: #{tpu_custom_call.1} parent=1 // pred_fallthru
      _
    %v74 = vld [vmem:[#allocation3] sm:$0xff]
    %v75 = vpack.c.bf16 %v74, %v74
    %v76 = vld [vmem:[#allocation6] sm:$0xf]
    %v77 = vld [vmem:[#allocation6 + $0x4] sm:$0xf]
    %v78 = vld [vmem:[#allocation6 + $0x8] sm:$0xf]
    %v79 = vld [vmem:[#allocation6 + $0xc] sm:$0xf]
    %v80 = vld [vmem:[%s2] sm:$0x1]
    %v82 = vperm.slane %v80, 0
    %v88 = vunpack.c.l.b16 %v76
    %v89 = vunpack.c.l.b16 %v77
    %v90 = vunpack.c.l.b16 %v78
    %v91 = vunpack.c.l.b16 %v79
    %v92 = vpack.c.b16 %v89, %v88
    %v93 = vpack.c.b16 %v91, %v90
    %vm96 = vcmask 261120
    %v98 = vsel %vm96, %v75, 0
    %100 = vmatpush.bf16.msra.mxu0 0
    %101 = vmatpush.bf16.msra.mxu0 0
    %102 = vmatpush.bf16.msra.mxu0 0
    %103 = vmatpush.bf16.msra.mxu0 0
    %104 = vmatpush.bf16.msra.mxu0 0
    %105 = vmatpush.bf16.msra.mxu0 0
    %106 = vmatpush.bf16.msra.mxu0 %v93
    %107 = vmatpush.bf16.msra.mxu0 %v92
    %108 = vmatmul.bf16.gmra.mxu0 %v98
    %v109 = vpop.f32.mrf.mxu0
    %v110 = vadd.f32 %v82, %v109
    %v111 = vpop.f32.mrf.mxu0
    %112 = vdwg.mxu0
    %v113 = vtanh.pop %v110
    %v114 = vpack.c.bf16 %v113, %v113
    %v115 = vld [vmem:[#allocation8] sm:$0xf]
    %v116 = vld [vmem:[#allocation8 + $0x4] sm:$0xf]
    %v117 = vld [vmem:[#allocation8 + $0x8] sm:$0xf]
    %v118 = vld [vmem:[#allocation8 + $0xc] sm:$0xf]
    %v119 = vld [vmem:[#allocation8 + $0x10] sm:$0xf]
    %v120 = vld [vmem:[#allocation8 + $0x14] sm:$0xf]
    %v121 = vld [vmem:[#allocation8 + $0x18] sm:$0xf]
    %v122 = vld [vmem:[#allocation8 + $0x1c] sm:$0xf]
    %v123 = vld [vmem:[#allocation8 + $0x20] sm:$0xf]
    %v124 = vld [vmem:[#allocation8 + $0x24] sm:$0xf]
    %v125 = vld [vmem:[#allocation8 + $0x28] sm:$0xf]
    %v126 = vld [vmem:[#allocation8 + $0x2c] sm:$0xf]
    %v127 = vld [vmem:[#allocation8 + $0x30] sm:$0xf]
    %v128 = vld [vmem:[#allocation8 + $0x34] sm:$0xf]
    %v129 = vld [vmem:[#allocation8 + $0x38] sm:$0xf]
    %v130 = vld [vmem:[#allocation8 + $0x3c] sm:$0xf]
    %v131 = vld [vmem:[%s4] sm:$0x1]
    %v133 = vperm.slane %v131, 0
    %v151 = vunpack.c.l.b16 %v115
    %v152 = vunpack.c.l.b16 %v116
    %v153 = vunpack.c.l.b16 %v117
    %v154 = vunpack.c.l.b16 %v118
    %v155 = vunpack.c.l.b16 %v119
    %v156 = vunpack.c.l.b16 %v120
    %v157 = vunpack.c.l.b16 %v121
    %v158 = vunpack.c.l.b16 %v122
    %v159 = vunpack.c.l.b16 %v123
    %v160 = vunpack.c.l.b16 %v124
    %v161 = vunpack.c.l.b16 %v125
    %v162 = vunpack.c.l.b16 %v126
    %v163 = vunpack.c.l.b16 %v127
    %v164 = vunpack.c.l.b16 %v128
    %v165 = vunpack.c.l.b16 %v129
    %v166 = vunpack.c.l.b16 %v130
    %v167 = vpack.c.b16 %v152, %v151
    %v168 = vpack.c.b16 %v154, %v153
    %v169 = vpack.c.b16 %v156, %v155
    %v170 = vpack.c.b16 %v158, %v157
    %v171 = vpack.c.b16 %v160, %v159
    %v172 = vpack.c.b16 %v162, %v161
    %v173 = vpack.c.b16 %v164, %v163
    %v174 = vpack.c.b16 %v166, %v165
    %183 = vmatpush.bf16.msra.mxu0 %v174
    %184 = vmatpush.bf16.msra.mxu0 %v173
    %185 = vmatpush.bf16.msra.mxu0 %v172
    %186 = vmatpush.bf16.msra.mxu0 %v171
    %187 = vmatpush.bf16.msra.mxu0 %v170
    %188 = vmatpush.bf16.msra.mxu0 %v169
    %189 = vmatpush.bf16.msra.mxu0 %v168
    %190 = vmatpush.bf16.msra.mxu0 %v167
    %191 = vmatmul.bf16.gmra.mxu0 %v114
    %v192 = vpop.f32.mrf.mxu0
    %v193 = vadd.f32 %v133, %v192
    %v194 = vpop.f32.mrf.mxu0
    %195 = vdwg.mxu0
    %v196 = vtanh.pop %v193
    %v197 = vld [vmem:[%s5] sm:$0x1]
    %v199 = vperm.slane %v197, 0
    %v201 = vmul.f32 %v196, %v199
    %202 = vadd.xlane.f32.xlu0 %v201
    %v203 = vpop.xlane.xlu0 %202
    %s204 = sld [smem:[#allocation2]]
    %v205 = vstv %s204
    %v206 = vadd.f32 %v203, %v205
    %v207 = vlaneseq
    %v208 = vand.u32 %v207, 127
    %vm209 = vcmp.lt.s32.totalorder %v208, 64
    %v210 = vsel %vm209, %v196, %v206
    %211 = vst [vmem:[#allocation9] sm:$0xff] %v210
    // Predicated region
    $region42: #{tpu_custom_call.1} parent=1 // pred_check
      _
    $region43: #{tpu_custom_call.1} parent=1 // pred_check_branch
      %213 = sbr.rel (0) target = $region45
    $region44: #{tpu_custom_call.1} parent=1 // pred_region
      %215 = vsyncadd [#allocation5], 0
      %s217 = sshll.u32 [#allocation9], 4
      %s218 = int_to_ptr.vmem [resolvable:$true] %s217
      %s219 = sshll.u32 %s7, 4
      %s220 = int_to_ptr.hbm [resolvable:$true] %s219
      %222 = dma.vmem_to_hbm [thread:$0]  %s218, 128, %s220, [#allocation5]
    $region45: #{tpu_custom_call.1} parent=1 // pred_fallthru
      _
    // Predicated region
    $region46: #{tpu_custom_call.1} parent=1 // pred_check
      _
    $region47: #{tpu_custom_call.1} parent=1 // pred_check_branch
      %224 = sbr.rel (0) target = $region49
    $region48: #{tpu_custom_call.1} parent=1 // pred_region
      %226 = dma.done [#allocation5], 128
    $region49: #{tpu_custom_call.1} parent=1 // pred_fallthru
      _
    %227 = vsyncpa [#allocation4], 1
    %228 = vsyncpa [#allocation7], 1
    %229 = vsyncpa [#allocation5], 1

</llo_original>
